<compile_context>
chip_gen: v5e
topology: v5e:2x2
jax: 0.10.0
libtpu: 0.0.40
codegen_flags: <defaults>
</compile_context>

<pallas_src>
import functools

import jax
import jax.numpy as jnp
from jax import lax
from jax.experimental import pallas as pl
from jax.experimental.pallas import tpu as pltpu


def _up2_conv3x3_relu_kernel(x_ref, w_ref, b_ref, o_ref, *, Wp, Lp):
    # x_ref: (Cin, Lin)        zero-padded, batch-row-stacked, spatially
    #                          flattened pre-upsample input, bf16
    # w_ref: (4*Cout, 9*Cin)   phase-stacked collapsed 3x3 weights, bf16
    # b_ref: (4*Cout, 1)       bias (tiled over the 4 phases), f32
    # o_ref: (4*Cout, Lp)      phase-major output slab, bf16
    xf = x_ref[...]
    # Shared im2col slab: the 9 shifted windows of the padded input, each a
    # pure static lane slice, stacked on the sublane axis.  Built ONCE for all
    # four phases (the stacked weight matrix zeroes the taps a phase ignores).
    patches = jnp.concatenate(
        [xf[:, r0 * Wp + c0: r0 * Wp + c0 + Lp]
         for r0 in range(3) for c0 in range(3)],
        axis=0)                                            # (9*Cin, Lp) bf16
    acc = jnp.dot(w_ref[...], patches,
                  preferred_element_type=jnp.float32)      # (4*Cout, Lp) f32
    o_ref[...] = jnp.maximum(acc + b_ref[...], 0.0).astype(o_ref.dtype)


@jax.jit
def unet_decoder_block(x_nchw, w_hwio, bias):
    """Forward of UnetDecoderBlock: nearest-x2 upsample -> Conv3x3(pad=1) -> ReLU.

    x_nchw: (N, Cin, H, W) f32; w_hwio: (3, 3, Cin, Cout); bias: (Cout,)
    returns: (N, Cout, 2H, 2W) f32
    """
    N, Cin, H, W = x_nchw.shape
    Cout = w_hwio.shape[-1]
    Hp, Wp = H + 3, W + 2                  # halo-padded pre-upsample extents
    Lu = N * Hp * Wp                       # useful lane span of the output slab
    Lp = ((Lu + 127) // 128) * 128         # lane-dense (multiple of 128)
    Lin = 2 * Wp + 2 + Lp                  # flat input length (max slice start + Lp)

    # ---- weight prep (tiny, one-time): collapse the 3x3 kernel into four 2x2
    # phase kernels (row/col sums), scatter each phase's 2x2 into its
    # (a:a+2, b:b+2) corner of a zero 3x3 grid, and stack the phases on the
    # output-channel axis -> ONE (4*Cout, 9*Cin) matmul serves all phases.
    R = jnp.array([[[1., 0., 0.], [0., 1., 1.]],
                   [[1., 1., 0.], [0., 0., 1.]]], jnp.float32)   # (phase, tap, src)
    w_eff = jnp.einsum('ard,bse,deio->abrsio', R, R,
                       w_hwio.astype(jnp.float32))               # (2,2,2,2,Cin,Cout)
    w_full = jnp.zeros((2, 2, 3, 3, Cin, Cout), jnp.float32)
    for a in range(2):
        for b in range(2):
            w_full = w_full.at[a, b, a:a + 2, b:b + 2].set(w_eff[a, b])
    w_stk = jnp.transpose(w_full, (0, 1, 5, 2, 3, 4)).reshape(4 * Cout, 9 * Cin)
    w_stk = w_stk.astype(jnp.bfloat16)                           # bf16 for the MXU
    b_stk = jnp.tile(bias.astype(jnp.float32), 4).reshape(4 * Cout, 1)

    # ---- input prep: bf16 up front (halves HBM->VMEM DMA), halo-pad the SMALL
    # pre-upsample input, stack the batch along rows, flatten spatially, and
    # zero-pad the tail so every in-kernel window slice of length Lp is in
    # bounds (tail/pad lanes produce garbage that glue drops).
    x_bf = x_nchw.astype(jnp.bfloat16)
    x_pad = jnp.pad(x_bf, ((0, 0), (0, 0), (1, 2), (1, 1)))      # (N,Cin,Hp,Wp)
    x_stk = jnp.transpose(x_pad, (1, 0, 2, 3)).reshape(Cin, Lu)  # batch on rows
    x_flat = jnp.pad(x_stk, ((0, 0), (0, Lin - Lu)))             # (Cin, Lin)

    kernel = functools.partial(_up2_conv3x3_relu_kernel, Wp=Wp, Lp=Lp)

    out = pl.pallas_call(
        kernel,
        out_shape=jax.ShapeDtypeStruct((4 * Cout, Lp), jnp.bfloat16),
        grid_spec=pltpu.PrefetchScalarGridSpec(
            num_scalar_prefetch=0,
            grid=(1,),                       # single step: batch lives on lanes
            in_specs=[
                pl.BlockSpec((Cin, Lin), lambda i: (0, 0)),
                pl.BlockSpec((4 * Cout, 9 * Cin), lambda i: (0, 0)),
                pl.BlockSpec((4 * Cout, 1), lambda i: (0, 0)),
            ],
            out_specs=pl.BlockSpec((4 * Cout, Lp), lambda i: (0, 0)),
        ),
    )(x_flat, w_stk, b_stk)

    # ---- glue: peel the 4 phases off the sublane axis, drop pad rows/columns
    # and the lane tail, and interleave the phases back onto the (2H, 2W) grid.
    y = out.reshape(2, 2, Cout, Lp)[..., :Lu].reshape(2, 2, Cout, N, Hp, Wp)
    y = y[..., :H, :W]                                   # (a, b, Cout, N, H, W)
    y = jnp.transpose(y, (3, 2, 4, 0, 5, 1))             # (N, Cout, H, a, W, b)
    return y.reshape(N, Cout, 2 * H, 2 * W).astype(jnp.float32)


def _reference(x_nchw, w_hwio, bias):
    """Pure-JAX reference: nearest x2 upsample -> SAME 3x3 conv -> +bias -> ReLU."""
    x_up = jnp.repeat(jnp.repeat(x_nchw, 2, axis=2), 2, axis=3)
    x_nhwc = jnp.transpose(x_up, (0, 2, 3, 1))
    y = lax.conv_general_dilated(
        x_nhwc, w_hwio, window_strides=(1, 1), padding="SAME",
        dimension_numbers=("NHWC", "HWIO", "NHWC"))
    y = jnp.maximum(y + bias[None, None, None, :], 0.0)
    return jnp.transpose(y, (0, 3, 1, 2))


if __name__ == "__main__":
    # UnetDecoderBlock(in_channels=4, middle_channels=..., out_channels=8);
    # middle_channels is unused by the module's forward.
    N, Cin, Cout, H, W = 2, 4, 8, 16, 16

    key = jax.random.PRNGKey(0)
    kx, kw, kb = jax.random.split(key, 3)
    x = jax.random.normal(kx, (N, Cin, H, W), jnp.float32)
    # Deterministic synthetic Conv2d parameters (HWIO layout).
    w_hwio = jax.random.normal(kw, (3, 3, Cin, Cout), jnp.float32) * 0.1
    bias = jax.random.normal(kb, (Cout,), jnp.float32) * 0.1

    out = jax.block_until_ready(unet_decoder_block(x, w_hwio, bias))
    ref = jax.block_until_ready(_reference(x, w_hwio, bias))

    assert out.shape == (N, Cout, 2 * H, 2 * W), out.shape
    max_err = float(jnp.max(jnp.abs(out - ref)))
    # bf16 MXU inputs / bf16 writeback with f32 accumulation -> rounding-level
    # mismatch only.
    assert jnp.allclose(out, ref, atol=5e-2, rtol=5e-2), f"mismatch: {max_err}"
    print("KERNEL_OK")
</pallas_src>

<mosaic_0001>
module attributes {stable_mosaic.version = 11 : i64} {
  func.func @_up2_conv3x3_relu_kernel(%arg0: i32, %arg1: memref<4x806xbf16, #tpu.memory_space<vmem>>, %arg2: memref<32x36xbf16, #tpu.memory_space<vmem>>, %arg3: memref<32x1xf32, #tpu.memory_space<vmem>>, %arg4: memref<32x768xbf16, #tpu.memory_space<vmem>>) attributes {dimension_semantics = [#tpu.dimension_semantics<arbitrary>], iteration_bounds = array<i64: 1>, scalar_prefetch = 0 : i64, scratch_operands = 0 : i64, tpu.core_type = #tpu.core_type<tc>, window_params = [{pipeline_mode = #tpu.pipeline_mode<synchronous>, transform_indices = @transform_0, window_bounds = array<i64: 4, 806>}, {pipeline_mode = #tpu.pipeline_mode<synchronous>, transform_indices = @transform_1, window_bounds = array<i64: 32, 36>}, {pipeline_mode = #tpu.pipeline_mode<synchronous>, transform_indices = @transform_2, window_bounds = array<i64: 32, 1>}, {pipeline_mode = #tpu.pipeline_mode<synchronous>, transform_indices = @transform_3, window_bounds = array<i64: 32, 768>}]} {
    %c0 = arith.constant 0 : index
    %c0_0 = arith.constant 0 : index
    %0 = vector.load %arg1[%c0, %c0_0] : memref<4x806xbf16, #tpu.memory_space<vmem>>, vector<4x806xbf16>
    %1 = vector.extract_strided_slice %0 {offsets = [0, 0], sizes = [4, 768], strides = [1, 1]} : vector<4x806xbf16> to vector<4x768xbf16>
    %2 = vector.extract_strided_slice %0 {offsets = [0, 1], sizes = [4, 768], strides = [1, 1]} : vector<4x806xbf16> to vector<4x768xbf16>
    %3 = vector.extract_strided_slice %0 {offsets = [0, 2], sizes = [4, 768], strides = [1, 1]} : vector<4x806xbf16> to vector<4x768xbf16>
    %4 = vector.extract_strided_slice %0 {offsets = [0, 18], sizes = [4, 768], strides = [1, 1]} : vector<4x806xbf16> to vector<4x768xbf16>
    %5 = vector.extract_strided_slice %0 {offsets = [0, 19], sizes = [4, 768], strides = [1, 1]} : vector<4x806xbf16> to vector<4x768xbf16>
    %6 = vector.extract_strided_slice %0 {offsets = [0, 20], sizes = [4, 768], strides = [1, 1]} : vector<4x806xbf16> to vector<4x768xbf16>
    %7 = vector.extract_strided_slice %0 {offsets = [0, 36], sizes = [4, 768], strides = [1, 1]} : vector<4x806xbf16> to vector<4x768xbf16>
    %8 = vector.extract_strided_slice %0 {offsets = [0, 37], sizes = [4, 768], strides = [1, 1]} : vector<4x806xbf16> to vector<4x768xbf16>
    %9 = vector.extract_strided_slice %0 {offsets = [0, 38], sizes = [4, 768], strides = [1, 1]} : vector<4x806xbf16> to vector<4x768xbf16>
    %10 = tpu.concatenate %1, %2, %3, %4, %5, %6, %7, %8, %9 in 0 : vector<4x768xbf16>, vector<4x768xbf16>, vector<4x768xbf16>, vector<4x768xbf16>, vector<4x768xbf16>, vector<4x768xbf16>, vector<4x768xbf16>, vector<4x768xbf16>, vector<4x768xbf16> -> vector<36x768xbf16>
    %c0_1 = arith.constant 0 : index
    %c0_2 = arith.constant 0 : index
    %11 = vector.load %arg2[%c0_1, %c0_2] : memref<32x36xbf16, #tpu.memory_space<vmem>>, vector<32x36xbf16>
    %cst = arith.constant dense<0.000000e+00> : vector<32x768xf32>
    %12 = tpu.matmul %11, %10, %cst {dimension_numbers = #tpu.dot_dimension_numbers<[1], [0], [0], [1], [0, 0, 1, 1], [], []>} : vector<32x36xbf16>, vector<36x768xbf16>, vector<32x768xf32> -> vector<32x768xf32>
    %c0_3 = arith.constant 0 : index
    %c0_4 = arith.constant 0 : index
    %13 = vector.load %arg3[%c0_3, %c0_4] : memref<32x1xf32, #tpu.memory_space<vmem>>, vector<32x1xf32>
    %14 = vector.broadcast %13 : vector<32x1xf32> to vector<32x768xf32>
    %15 = arith.addf %12, %14 : vector<32x768xf32>
    %cst_5 = arith.constant 0.000000e+00 : f32
    %16 = vector.broadcast %cst_5 : f32 to vector<32x768xf32>
    %17 = arith.maximumf %15, %16 : vector<32x768xf32>
    %18 = arith.truncf %17 : vector<32x768xf32> to vector<32x768xbf16>
    %c0_6 = arith.constant 0 : index
    %c0_7 = arith.constant 0 : index
    %19 = vector.load %arg4[%c0_6, %c0_7] : memref<32x768xbf16, #tpu.memory_space<vmem>>, vector<32x768xbf16>
    tpu.vector_store %arg4[%c0_6, %c0_7], %18 {strides = array<i32>} : memref<32x768xbf16, #tpu.memory_space<vmem>>, vector<32x768xbf16>,
    return
  }
  func.func @transform_0(%arg0: i32) -> (i32, i32) {
    %c0_i32 = arith.constant 0 : i32
    %c0_i32_0 = arith.constant 0 : i32
    %c0_i32_1 = arith.constant 0 : i32
    return %c0_i32, %c0_i32_0 : i32, i32
  }
  func.func @transform_1(%arg0: i32) -> (i32, i32) {
    %c0_i32 = arith.constant 0 : i32
    %c0_i32_0 = arith.constant 0 : i32
    %c0_i32_1 = arith.constant 0 : i32
    return %c0_i32, %c0_i32_0 : i32, i32
  }
  func.func @transform_2(%arg0: i32) -> (i32, i32) {
    %c0_i32 = arith.constant 0 : i32
    %c0_i32_0 = arith.constant 0 : i32
    %c0_i32_1 = arith.constant 0 : i32
    return %c0_i32, %c0_i32_0 : i32, i32
  }
  func.func @transform_3(%arg0: i32) -> (i32, i32) {
    %c0_i32 = arith.constant 0 : i32
    %c0_i32_0 = arith.constant 0 : i32
    %c0_i32_1 = arith.constant 0 : i32
    return %c0_i32, %c0_i32_0 : i32, i32
  }
}

</mosaic_0001>

<llo_original>
// kernel: tile.8
$region0: #{tile.8}
  #allocation0 [shape = 's32[1]{0}', space=sflag, size = 0x4, scoped, tag = 'scoped memory for tile.8']
  %s0 = inlined_call_operand.vmem [shape: f32[8], index: 0, kind: input, shape index: {}]
  %s1 = inlined_call_operand.vmem [shape: f32[4,8], index: 1, kind: output, shape index: {}]
  // Predicated region
  $region2: #{tile.8} parent=0 // pred_check
    _
  $region3: #{tile.8} parent=0 // pred_check_branch
    %3 = sbr.rel (0) target = $region5
  $region4: #{tile.8} parent=0 // pred_region
    _
  $region5: #{tile.8} parent=0 // pred_fallthru
    _
  %v4 = vld [vmem:[%s0] ss:$0 sm:$0xff]
  %5 = vst [vmem:[%s1] sm:$0xf] %v4

// kernel: tile.0
$region0: #{tile.0}
  %s0 = inlined_call_operand.vmem [shape: f32[4,8], index: 0, kind: input, shape index: {}]
  %s1 = inlined_call_operand.vmem [shape: f32[32,1], index: 1, kind: output, shape index: {}]
  $region1: #{tile.0} parent=0
    #allocation0 [shape = 'u8[4096]{0}', space=vmem, size = 0x1000, scoped, tag = 'scoped mem for input reshape']
    %s3 = ssub.s32 16, 1
    %v4 = vld [vmem:[%s0] sm:%s3]
    %5 = vst [vmem:[#allocation0] sm:%s3] %v4
    %v6 = vld [vmem:[#allocation0] sm:$0xf]
    %vm7 = vcmask 7168
    %8 = vst.msk [vmem:[%s1] ss:$8 sm:$0xf] %vm7, %v6
    %v9 = vld [vmem:[#allocation0] sm:$0xf]
    %10 = vrot.lane.b32.xlu0 %v9, 127
    %v11 = vpop.permute.xlu0 %10
    %vm12 = vcmask 7168
    %s13 = scalar_lea.vmem %s1, 1
    %14 = vst.msk [vmem:[%s13] ss:$8 sm:$0xf] %vm12, %v11
    %v15 = vld [vmem:[#allocation0] sm:$0xf]
    %16 = vrot.lane.b32.xlu0 %v15, 126
    %v17 = vpop.permute.xlu0 %16
    %vm18 = vcmask 7168
    %s19 = scalar_lea.vmem %s1, 2
    %20 = vst.msk [vmem:[%s19] ss:$8 sm:$0xf] %vm18, %v17
    %v21 = vld [vmem:[#allocation0] sm:$0xf]
    %22 = vrot.lane.b32.xlu0 %v21, 125
    %v23 = vpop.permute.xlu0 %22
    %vm24 = vcmask 7168
    %s25 = scalar_lea.vmem %s1, 3
    %26 = vst.msk [vmem:[%s25] ss:$8 sm:$0xf] %vm24, %v23
    %v27 = vld [vmem:[#allocation0] sm:$0xf]
    %28 = vrot.lane.b32.xlu0 %v27, 124
    %v29 = vpop.permute.xlu0 %28
    %vm30 = vcmask 7168
    %s31 = scalar_lea.vmem %s1, 4
    %32 = vst.msk [vmem:[%s31] ss:$8 sm:$0xf] %vm30, %v29
    %v33 = vld [vmem:[#allocation0] sm:$0xf]
    %34 = vrot.lane.b32.xlu0 %v33, 123
    %v35 = vpop.permute.xlu0 %34
    %vm36 = vcmask 7168
    %s37 = scalar_lea.vmem %s1, 5
    %38 = vst.msk [vmem:[%s37] ss:$8 sm:$0xf] %vm36, %v35
    %v39 = vld [vmem:[#allocation0] sm:$0xf]
    %40 = vrot.lane.b32.xlu0 %v39, 122
    %v41 = vpop.permute.xlu0 %40
    %vm42 = vcmask 7168
    %s43 = scalar_lea.vmem %s1, 6
    %44 = vst.msk [vmem:[%s43] ss:$8 sm:$0xf] %vm42, %v41
    %v45 = vld [vmem:[#allocation0] sm:$0xf]
    %46 = vrot.lane.b32.xlu0 %v45, 121
    %v47 = vpop.permute.xlu0 %46
    %vm48 = vcmask 7168
    %s49 = scalar_lea.vmem %s1, 7
    %50 = vst.msk [vmem:[%s49] ss:$8 sm:$0xf] %vm48, %v47

// kernel: unet_decoder_block.1
$region0: #{unet_decoder_block.1}
  #allocation0 [shape = 'u32[]', space=smem, size = 0x4, offset = 0x4, fixed_abs, tag = 'smem constant byte address 0x4 - core index']
  #allocation1 [shape = 'u32[72,128]{1,0:T(1,128)}', space=vmem, size = 0x9000, scoped, tag = 'internal scratch']
  %s0 = inlined_call_operand.vmem [shape: bf16[4,806], index: 0, kind: input, shape index: {}]
  %s1 = inlined_call_operand.vmem [shape: bf16[32,36], index: 1, kind: input, shape index: {}]
  %s2 = inlined_call_operand.vmem [shape: f32[32,1], index: 2, kind: input, shape index: {}]
  %s3 = inlined_call_operand.vmem [shape: bf16[32,768], index: 3, kind: output, shape index: {}]
  %s4 = sld [smem:[#allocation0]]
  $region22: #{unet_decoder_block.1} parent=0
    _
  %s6 = ssub.s32 1, %s4
  %s7 = scalar_select 0, %s6, %s4
  // Predicated region
  $region2: #{unet_decoder_block.1} parent=0 // pred_check
    _
  $region3: #{unet_decoder_block.1} parent=0 // pred_check_branch
    %9 = sbr.rel (0) target = $region5
  $region4: #{unet_decoder_block.1} parent=0 // pred_region
    _
  $region5: #{unet_decoder_block.1} parent=0 // pred_fallthru
    _
  // Predicated region
  $region6: #{unet_decoder_block.1} parent=0 // pred_check
    _
  $region7: #{unet_decoder_block.1} parent=0 // pred_check_branch
    %11 = sbr.rel (0) target = $region9
  $region8: #{unet_decoder_block.1} parent=0 // pred_region
    _
  $region9: #{unet_decoder_block.1} parent=0 // pred_fallthru
    _
  // Predicated region
  $region10: #{unet_decoder_block.1} parent=0 // pred_check
    _
  $region11: #{unet_decoder_block.1} parent=0 // pred_check_branch
    %13 = sbr.rel (0) target = $region13
  $region12: #{unet_decoder_block.1} parent=0 // pred_region
    _
  $region13: #{unet_decoder_block.1} parent=0 // pred_fallthru
    _
  %v15 = vld [vmem:[%s0] sm:$0xff]
  %v16 = vld [vmem:[%s0 + $0x8] sm:$0x3f]
  %18 = vst [vmem:[#allocation1] ss:$4 sm:$0xff] %v15
  %s20 = scalar_lea.vmem [#allocation1], 32
  %21 = vst [vmem:[%s20] ss:$4 sm:$0xff] %v16
  %v22 = vld.sshfl [vmem:[#allocation1] sm:$0xff pattern:$0x73625140]
  %v23 = vld.sshfl [vmem:[#allocation1 + $0x8] sm:$0xff pattern:$0x73625140]
  %v24 = vld.sshfl [vmem:[#allocation1 + $0x10] sm:$0xff pattern:$0x73625140]
  %v25 = vld.sshfl [vmem:[#allocation1 + $0x18] sm:$0xff pattern:$0x73625140]
  %v26 = vld.sshfl [vmem:[#allocation1 + $0x20] sm:$0xff pattern:$0x73625140]
  %v27 = vld.sshfl [vmem:[#allocation1 + $0x28] sm:$0xff pattern:$0x73625140]
  %s28 = scalar_lea.vmem [#allocation1], 1
  %29 = vst [vmem:[%s28] ss:$4 sm:$0xff] %v15
  %s30 = scalar_lea.vmem [#allocation1], 33
  %31 = vst [vmem:[%s30] ss:$4 sm:$0xff] %v16
  %v32 = vld.sshfl [vmem:[#allocation1] sm:$0xff pattern:$0x73625140]
  %v34 = vld.sshfl [vmem:[#allocation1 + $0x8] sm:$0xff pattern:$0x73625140]
  %v36 = vld.sshfl [vmem:[#allocation1 + $0x10] sm:$0xff pattern:$0x73625140]
  %v38 = vld.sshfl [vmem:[#allocation1 + $0x18] sm:$0xff pattern:$0x73625140]
  %v40 = vld.sshfl [vmem:[#allocation1 + $0x20] sm:$0xff pattern:$0x73625140]
  %v42 = vld.sshfl [vmem:[#allocation1 + $0x28] sm:$0xff pattern:$0x73625140]
  %v44 = vld.sshfl [vmem:[#allocation1 + $0x30] sm:$0xff pattern:$0x73625140]
  %46 = vrot.lane.b32.xlu0 %v32, 127
  %v47 = vpop.permute.xlu0 %46
  %48 = vrot.lane.b32.xlu0 %v34, 127
  %v49 = vpop.permute.xlu0 %48
  %50 = vrot.lane.b32.xlu0 %v36, 127
  %v51 = vpop.permute.xlu0 %50
  %52 = vrot.lane.b32.xlu0 %v38, 127
  %v53 = vpop.permute.xlu0 %52
  %54 = vrot.lane.b32.xlu0 %v40, 127
  %v55 = vpop.permute.xlu0 %54
  %56 = vrot.lane.b32.xlu0 %v42, 127
  %v57 = vpop.permute.xlu0 %56
  %58 = vrot.lane.b32.xlu0 %v44, 127
  %v59 = vpop.permute.xlu0 %58
  %vm60 = vcmask 1039360
  %v61 = vsel %vm60, %v47, %v49
  %v62 = vsel %vm60, %v49, %v51
  %v63 = vsel %vm60, %v51, %v53
  %v64 = vsel %vm60, %v53, %v55
  %v65 = vsel %vm60, %v55, %v57
  %v66 = vsel %vm60, %v57, %v59
  %s67 = scalar_lea.vmem [#allocation1], 2
  %68 = vst [vmem:[%s67] ss:$4 sm:$0xff] %v15
  %s69 = scalar_lea.vmem [#allocation1], 34
  %70 = vst [vmem:[%s69] ss:$4 sm:$0xff] %v16
  %v71 = vld.sshfl [vmem:[#allocation1] sm:$0xff pattern:$0x73625140]
  %v73 = vld.sshfl [vmem:[#allocation1 + $0x8] sm:$0xff pattern:$0x73625140]
  %v75 = vld.sshfl [vmem:[#allocation1 + $0x10] sm:$0xff pattern:$0x73625140]
  %v77 = vld.sshfl [vmem:[#allocation1 + $0x18] sm:$0xff pattern:$0x73625140]
  %v79 = vld.sshfl [vmem:[#allocation1 + $0x20] sm:$0xff pattern:$0x73625140]
  %v81 = vld.sshfl [vmem:[#allocation1 + $0x28] sm:$0xff pattern:$0x73625140]
  %v83 = vld.sshfl [vmem:[#allocation1 + $0x30] sm:$0xff pattern:$0x73625140]
  %85 = vrot.lane.b32.xlu0 %v71, 126
  %v86 = vpop.permute.xlu0 %85
  %87 = vrot.lane.b32.xlu0 %v73, 126
  %v88 = vpop.permute.xlu0 %87
  %89 = vrot.lane.b32.xlu0 %v75, 126
  %v90 = vpop.permute.xlu0 %89
  %91 = vrot.lane.b32.xlu0 %v77, 126
  %v92 = vpop.permute.xlu0 %91
  %93 = vrot.lane.b32.xlu0 %v79, 126
  %v94 = vpop.permute.xlu0 %93
  %95 = vrot.lane.b32.xlu0 %v81, 126
  %v96 = vpop.permute.xlu0 %95
  %97 = vrot.lane.b32.xlu0 %v83, 126
  %v98 = vpop.permute.xlu0 %97
  %vm99 = vcmask 1031168
  %v100 = vsel %vm99, %v86, %v88
  %v101 = vsel %vm99, %v88, %v90
  %v102 = vsel %vm99, %v90, %v92
  %v103 = vsel %vm99, %v92, %v94
  %v104 = vsel %vm99, %v94, %v96
  %v105 = vsel %vm99, %v96, %v98
  %s106 = scalar_lea.vmem [#allocation1], 3
  %107 = vst [vmem:[%s106] ss:$4 sm:$0xff] %v15
  %s108 = scalar_lea.vmem [#allocation1], 35
  %109 = vst [vmem:[%s108] ss:$4 sm:$0xff] %v16
  %v110 = vld.sshfl [vmem:[#allocation1] sm:$0xff pattern:$0x73625140]
  %v112 = vld.sshfl [vmem:[#allocation1 + $0x8] sm:$0xff pattern:$0x73625140]
  %v114 = vld.sshfl [vmem:[#allocation1 + $0x10] sm:$0xff pattern:$0x73625140]
  %v116 = vld.sshfl [vmem:[#allocation1 + $0x18] sm:$0xff pattern:$0x73625140]
  %v118 = vld.sshfl [vmem:[#allocation1 + $0x20] sm:$0xff pattern:$0x73625140]
  %v120 = vld.sshfl [vmem:[#allocation1 + $0x28] sm:$0xff pattern:$0x73625140]
  %v122 = vld.sshfl [vmem:[#allocation1 + $0x30] sm:$0xff pattern:$0x73625140]
  %124 = vrot.lane.b32.xlu0 %v110, 110
  %v125 = vpop.permute.xlu0 %124
  %126 = vrot.lane.b32.xlu0 %v112, 110
  %v127 = vpop.permute.xlu0 %126
  %128 = vrot.lane.b32.xlu0 %v114, 110
  %v129 = vpop.permute.xlu0 %128
  %130 = vrot.lane.b32.xlu0 %v116, 110
  %v131 = vpop.permute.xlu0 %130
  %132 = vrot.lane.b32.xlu0 %v118, 110
  %v133 = vpop.permute.xlu0 %132
  %134 = vrot.lane.b32.xlu0 %v120, 110
  %v135 = vpop.permute.xlu0 %134
  %136 = vrot.lane.b32.xlu0 %v122, 110
  %v137 = vpop.permute.xlu0 %136
  %vm138 = vcmask 900096
  %v139 = vsel %vm138, %v125, %v127
  %v140 = vsel %vm138, %v127, %v129
  %v141 = vsel %vm138, %v129, %v131
  %v142 = vsel %vm138, %v131, %v133
  %v143 = vsel %vm138, %v133, %v135
  %v144 = vsel %vm138, %v135, %v137
  %145 = vst [vmem:[#allocation1] ss:$4 sm:$0xff] %v15
  %s146 = scalar_lea.vmem [#allocation1], 32
  %147 = vst [vmem:[%s146] ss:$4 sm:$0xff] %v16
  %v148 = vld.sshfl [vmem:[#allocation1] sm:$0xff pattern:$0x73625140]
  %v150 = vld.sshfl [vmem:[#allocation1 + $0x8] sm:$0xff pattern:$0x73625140]
  %v152 = vld.sshfl [vmem:[#allocation1 + $0x10] sm:$0xff pattern:$0x73625140]
  %v154 = vld.sshfl [vmem:[#allocation1 + $0x18] sm:$0xff pattern:$0x73625140]
  %v156 = vld.sshfl [vmem:[#allocation1 + $0x20] sm:$0xff pattern:$0x73625140]
  %v158 = vld.sshfl [vmem:[#allocation1 + $0x28] sm:$0xff pattern:$0x73625140]
  %v160 = vld.sshfl [vmem:[#allocation1 + $0x30] sm:$0xff pattern:$0x73625140]
  %162 = vrot.lane.b32.xlu0 %v148, 109
  %v163 = vpop.permute.xlu0 %162
  %164 = vrot.lane.b32.xlu0 %v150, 109
  %v165 = vpop.permute.xlu0 %164
  %166 = vrot.lane.b32.xlu0 %v152, 109
  %v167 = vpop.permute.xlu0 %166
  %168 = vrot.lane.b32.xlu0 %v154, 109
  %v169 = vpop.permute.xlu0 %168
  %170 = vrot.lane.b32.xlu0 %v156, 109
  %v171 = vpop.permute.xlu0 %170
  %172 = vrot.lane.b32.xlu0 %v158, 109
  %v173 = vpop.permute.xlu0 %172
  %174 = vrot.lane.b32.xlu0 %v160, 109
  %v175 = vpop.permute.xlu0 %174
  %vm176 = vcmask 891904
  %v177 = vsel %vm176, %v163, %v165
  %v178 = vsel %vm176, %v165, %v167
  %v179 = vsel %vm176, %v167, %v169
  %v180 = vsel %vm176, %v169, %v171
  %v181 = vsel %vm176, %v171, %v173
  %v182 = vsel %vm176, %v173, %v175
  %s183 = scalar_lea.vmem [#allocation1], 1
  %184 = vst [vmem:[%s183] ss:$4 sm:$0xff] %v15
  %s185 = scalar_lea.vmem [#allocation1], 33
  %186 = vst [vmem:[%s185] ss:$4 sm:$0xff] %v16
  %v187 = vld.sshfl [vmem:[#allocation1] sm:$0xff pattern:$0x73625140]
  %v189 = vld.sshfl [vmem:[#allocation1 + $0x8] sm:$0xff pattern:$0x73625140]
  %v191 = vld.sshfl [vmem:[#allocation1 + $0x10] sm:$0xff pattern:$0x73625140]
  %v193 = vld.sshfl [vmem:[#allocation1 + $0x18] sm:$0xff pattern:$0x73625140]
  %v195 = vld.sshfl [vmem:[#allocation1 + $0x20] sm:$0xff pattern:$0x73625140]
  %v197 = vld.sshfl [vmem:[#allocation1 + $0x28] sm:$0xff pattern:$0x73625140]
  %v199 = vld.sshfl [vmem:[#allocation1 + $0x30] sm:$0xff pattern:$0x73625140]
  %201 = vrot.lane.b32.xlu0 %v187, 108
  %v202 = vpop.permute.xlu0 %201
  %203 = vrot.lane.b32.xlu0 %v189, 108
  %v204 = vpop.permute.xlu0 %203
  %205 = vrot.lane.b32.xlu0 %v191, 108
  %v206 = vpop.permute.xlu0 %205
  %207 = vrot.lane.b32.xlu0 %v193, 108
  %v208 = vpop.permute.xlu0 %207
  %209 = vrot.lane.b32.xlu0 %v195, 108
  %v210 = vpop.permute.xlu0 %209
  %211 = vrot.lane.b32.xlu0 %v197, 108
  %v212 = vpop.permute.xlu0 %211
  %213 = vrot.lane.b32.xlu0 %v199, 108
  %v214 = vpop.permute.xlu0 %213
  %vm215 = vcmask 883712
  %v216 = vsel %vm215, %v202, %v204
  %v217 = vsel %vm215, %v204, %v206
  %v218 = vsel %vm215, %v206, %v208
  %v219 = vsel %vm215, %v208, %v210
  %v220 = vsel %vm215, %v210, %v212
  %v221 = vsel %vm215, %v212, %v214
  %s222 = scalar_lea.vmem [#allocation1], 2
  %223 = vst [vmem:[%s222] ss:$4 sm:$0xff] %v15
  %s224 = scalar_lea.vmem [#allocation1], 34
  %225 = vst [vmem:[%s224] ss:$4 sm:$0xff] %v16
  %v226 = vld.sshfl [vmem:[#allocation1] sm:$0xff pattern:$0x73625140]
  %v228 = vld.sshfl [vmem:[#allocation1 + $0x8] sm:$0xff pattern:$0x73625140]
  %v230 = vld.sshfl [vmem:[#allocation1 + $0x10] sm:$0xff pattern:$0x73625140]
  %v232 = vld.sshfl [vmem:[#allocation1 + $0x18] sm:$0xff pattern:$0x73625140]
  %v234 = vld.sshfl [vmem:[#allocation1 + $0x20] sm:$0xff pattern:$0x73625140]
  %v236 = vld.sshfl [vmem:[#allocation1 + $0x28] sm:$0xff pattern:$0x73625140]
  %v238 = vld.sshfl [vmem:[#allocation1 + $0x30] sm:$0xff pattern:$0x73625140]
  %240 = vrot.lane.b32.xlu0 %v226, 92
  %v241 = vpop.permute.xlu0 %240
  %242 = vrot.lane.b32.xlu0 %v228, 92
  %v243 = vpop.permute.xlu0 %242
  %244 = vrot.lane.b32.xlu0 %v230, 92
  %v245 = vpop.permute.xlu0 %244
  %246 = vrot.lane.b32.xlu0 %v232, 92
  %v247 = vpop.permute.xlu0 %246
  %248 = vrot.lane.b32.xlu0 %v234, 92
  %v249 = vpop.permute.xlu0 %248
  %250 = vrot.lane.b32.xlu0 %v236, 92
  %v251 = vpop.permute.xlu0 %250
  %252 = vrot.lane.b32.xlu0 %v238, 92
  %v253 = vpop.permute.xlu0 %252
  %vm254 = vcmask 752640
  %v255 = vsel %vm254, %v241, %v243
  %v256 = vsel %vm254, %v243, %v245
  %v257 = vsel %vm254, %v245, %v247
  %v258 = vsel %vm254, %v247, %v249
  %v259 = vsel %vm254, %v249, %v251
  %v260 = vsel %vm254, %v251, %v253
  %s261 = scalar_lea.vmem [#allocation1], 3
  %262 = vst [vmem:[%s261] ss:$4 sm:$0xff] %v15
  %s263 = scalar_lea.vmem [#allocation1], 35
  %264 = vst [vmem:[%s263] ss:$4 sm:$0xff] %v16
  %v265 = vld.sshfl [vmem:[#allocation1] sm:$0xff pattern:$0x73625140]
  %v267 = vld.sshfl [vmem:[#allocation1 + $0x8] sm:$0xff pattern:$0x73625140]
  %v269 = vld.sshfl [vmem:[#allocation1 + $0x10] sm:$0xff pattern:$0x73625140]
  %v271 = vld.sshfl [vmem:[#allocation1 + $0x18] sm:$0xff pattern:$0x73625140]
  %v273 = vld.sshfl [vmem:[#allocation1 + $0x20] sm:$0xff pattern:$0x73625140]
  %v275 = vld.sshfl [vmem:[#allocation1 + $0x28] sm:$0xff pattern:$0x73625140]
  %v277 = vld.sshfl [vmem:[#allocation1 + $0x30] sm:$0xff pattern:$0x73625140]
  %279 = vrot.lane.b32.xlu0 %v265, 91
  %v280 = vpop.permute.xlu0 %279
  %281 = vrot.lane.b32.xlu0 %v267, 91
  %v282 = vpop.permute.xlu0 %281
  %283 = vrot.lane.b32.xlu0 %v269, 91
  %v284 = vpop.permute.xlu0 %283
  %285 = vrot.lane.b32.xlu0 %v271, 91
  %v286 = vpop.permute.xlu0 %285
  %287 = vrot.lane.b32.xlu0 %v273, 91
  %v288 = vpop.permute.xlu0 %287
  %289 = vrot.lane.b32.xlu0 %v275, 91
  %v290 = vpop.permute.xlu0 %289
  %291 = vrot.lane.b32.xlu0 %v277, 91
  %v292 = vpop.permute.xlu0 %291
  %vm293 = vcmask 744448
  %v294 = vsel %vm293, %v280, %v282
  %v295 = vsel %vm293, %v282, %v284
  %v296 = vsel %vm293, %v284, %v286
  %v297 = vsel %vm293, %v286, %v288
  %v298 = vsel %vm293, %v288, %v290
  %v299 = vsel %vm293, %v290, %v292
  %300 = vst [vmem:[#allocation1] ss:$4 sm:$0xff] %v15
  %s301 = scalar_lea.vmem [#allocation1], 32
  %302 = vst [vmem:[%s301] ss:$4 sm:$0xff] %v16
  %v303 = vld.sshfl [vmem:[#allocation1] sm:$0xff pattern:$0x73625140]
  %v305 = vld.sshfl [vmem:[#allocation1 + $0x8] sm:$0xff pattern:$0x73625140]
  %v307 = vld.sshfl [vmem:[#allocation1 + $0x10] sm:$0xff pattern:$0x73625140]
  %v309 = vld.sshfl [vmem:[#allocation1 + $0x18] sm:$0xff pattern:$0x73625140]
  %v311 = vld.sshfl [vmem:[#allocation1 + $0x20] sm:$0xff pattern:$0x73625140]
  %v313 = vld.sshfl [vmem:[#allocation1 + $0x28] sm:$0xff pattern:$0x73625140]
  %v315 = vld.sshfl [vmem:[#allocation1 + $0x30] sm:$0xff pattern:$0x73625140]
  %317 = vrot.lane.b32.xlu0 %v303, 90
  %v318 = vpop.permute.xlu0 %317
  %319 = vrot.lane.b32.xlu0 %v305, 90
  %v320 = vpop.permute.xlu0 %319
  %321 = vrot.lane.b32.xlu0 %v307, 90
  %v322 = vpop.permute.xlu0 %321
  %323 = vrot.lane.b32.xlu0 %v309, 90
  %v324 = vpop.permute.xlu0 %323
  %325 = vrot.lane.b32.xlu0 %v311, 90
  %v326 = vpop.permute.xlu0 %325
  %327 = vrot.lane.b32.xlu0 %v313, 90
  %v328 = vpop.permute.xlu0 %327
  %329 = vrot.lane.b32.xlu0 %v315, 90
  %v330 = vpop.permute.xlu0 %329
  %vm331 = vcmask 736256
  %v332 = vsel %vm331, %v318, %v320
  %v333 = vsel %vm331, %v320, %v322
  %v334 = vsel %vm331, %v322, %v324
  %v335 = vsel %vm331, %v324, %v326
  %v336 = vsel %vm331, %v326, %v328
  %v337 = vsel %vm331, %v328, %v330
  %vm338 = vcmask 1041408
  %v340 = vsel %vm338, %v22, %v61
  %v342 = vsel %vm338, %v23, %v62
  %v344 = vsel %vm338, %v24, %v63
  %v346 = vsel %vm338, %v25, %v64
  %v348 = vsel %vm338, %v26, %v65
  %v350 = vsel %vm338, %v27, %v66
  %vm351 = vcmask 1043456
  %v353 = vsel %vm351, %v340, %v100
  %v355 = vsel %vm351, %v342, %v101
  %v357 = vsel %vm351, %v344, %v102
  %v359 = vsel %vm351, %v346, %v103
  %v361 = vsel %vm351, %v348, %v104
  %v363 = vsel %vm351, %v350, %v105
  %vm364 = vcmask 1045504
  %v366 = vsel %vm364, %v353, %v139
  %v369 = vsel %vm364, %v355, %v140
  %v372 = vsel %vm364, %v357, %v141
  %v375 = vsel %vm364, %v359, %v142
  %v378 = vsel %vm364, %v361, %v143
  %v381 = vsel %vm364, %v363, %v144
  %v385 = vsel %vm338, %v177, %v216
  %v388 = vsel %vm338, %v178, %v217
  %v391 = vsel %vm338, %v179, %v218
  %v394 = vsel %vm338, %v180, %v219
  %v397 = vsel %vm338, %v181, %v220
  %v400 = vsel %vm338, %v182, %v221
  %v402 = vsel %vm351, %v385, %v255
  %v404 = vsel %vm351, %v388, %v256
  %v406 = vsel %vm351, %v391, %v257
  %v408 = vsel %vm351, %v394, %v258
  %v410 = vsel %vm351, %v397, %v259
  %v412 = vsel %vm351, %v400, %v260
  %v414 = vsel %vm364, %v402, %v294
  %v417 = vsel %vm364, %v404, %v295
  %v420 = vsel %vm364, %v406, %v296
  %v423 = vsel %vm364, %v408, %v297
  %v426 = vsel %vm364, %v410, %v298
  %v429 = vsel %vm364, %v412, %v299
  %v431 = vld [vmem:[%s1] sm:$0xf]
  %v432 = vld [vmem:[%s1 + $0x4] sm:$0xf]
  %v433 = vld [vmem:[%s1 + $0x8] sm:$0xf]
  %v434 = vld [vmem:[%s1 + $0xc] sm:$0xf]
  %v435 = vld [vmem:[%s2] sm:$0xff]
  %v436 = vld [vmem:[%s2 + $0x8] sm:$0xff]
  %v437 = vld [vmem:[%s2 + $0x10] sm:$0xff]
  %v438 = vld [vmem:[%s2 + $0x18] sm:$0xff]
  %440 = vset.pattern.permute.xlu0 0
  %441 = vperm.xlu0 %440, %v435
  %v442 = vpop.permute.xlu0 %441
  %445 = vset.pattern.permute.xlu0 0
  %446 = vperm.xlu0 %445, %v436
  %v447 = vpop.permute.xlu0 %446
  %450 = vset.pattern.permute.xlu0 0
  %451 = vperm.xlu0 %450, %v437
  %v452 = vpop.permute.xlu0 %451
  %455 = vset.pattern.permute.xlu0 0
  %456 = vperm.xlu0 %455, %v438
  %v457 = vpop.permute.xlu0 %456
  %v463 = vunpack.c.l.b16 %v431
  %v464 = vunpack.c.l.b16 %v432
  %v465 = vunpack.c.l.b16 %v433
  %v466 = vunpack.c.l.b16 %v434
  %v467 = vpack.c.b16 %v464, %v463
  %v468 = vpack.c.b16 %v466, %v465
  %vm469 = vcmask 293888
  %v471 = vsel %vm469, %v467, 0
  %v474 = vsel %vm469, %v468, 0
  %v477 = vsel %vm338, %v332, 0
  %v480 = vsel %vm338, %v333, 0
  %v483 = vsel %vm338, %v334, 0
  %v486 = vsel %vm338, %v335, 0
  %v489 = vsel %vm338, %v336, 0
  %v492 = vsel %vm338, %v337, 0
  %494 = vmatpush.bf16.msra.mxu0 0
  %495 = vmatpush.bf16.msra.mxu0 0
  %496 = vmatpush.bf16.msra.mxu0 0
  %497 = vmatpush.bf16.msra.mxu0 0
  %498 = vmatpush.bf16.msra.mxu0 0
  %499 = vmatpush.bf16.msra.mxu0 %v477
  %500 = vmatpush.bf16.msra.mxu0 %v414
  %501 = vmatpush.bf16.msra.mxu0 %v366
  %502 = vmatmul.bf16.gmra.mxu0 %v471
  %v503 = vpop.f32.mrf.mxu0
  %v504 = vadd.f32 %v442, %v503
  %v505 = vpop.f32.mrf.mxu0
  %v506 = vadd.f32 %v447, %v505
  %507 = vmatmul.bf16.gmra.mxu0 %v474
  %v508 = vpop.f32.mrf.mxu0
  %v509 = vadd.f32 %v452, %v508
  %v510 = vpop.f32.mrf.mxu0
  %v511 = vadd.f32 %v457, %v510
  %512 = vdwg.mxu0
  %513 = vmatpush.bf16.msra.mxu0 0
  %514 = vmatpush.bf16.msra.mxu0 0
  %515 = vmatpush.bf16.msra.mxu0 0
  %516 = vmatpush.bf16.msra.mxu0 0
  %517 = vmatpush.bf16.msra.mxu0 0
  %518 = vmatpush.bf16.msra.mxu0 %v480
  %519 = vmatpush.bf16.msra.mxu0 %v417
  %520 = vmatpush.bf16.msra.mxu0 %v369
  %521 = vmatmul.bf16.gmra.mxu0 %v471
  %v522 = vpop.f32.mrf.mxu0
  %v523 = vadd.f32 %v442, %v522
  %v524 = vpop.f32.mrf.mxu0
  %v525 = vadd.f32 %v447, %v524
  %526 = vmatmul.bf16.gmra.mxu0 %v474
  %v527 = vpop.f32.mrf.mxu0
  %v528 = vadd.f32 %v452, %v527
  %v529 = vpop.f32.mrf.mxu0
  %v530 = vadd.f32 %v457, %v529
  %531 = vdwg.mxu0
  %532 = vmatpush.bf16.msra.mxu0 0
  %533 = vmatpush.bf16.msra.mxu0 0
  %534 = vmatpush.bf16.msra.mxu0 0
  %535 = vmatpush.bf16.msra.mxu0 0
  %536 = vmatpush.bf16.msra.mxu0 0
  %537 = vmatpush.bf16.msra.mxu0 %v483
  %538 = vmatpush.bf16.msra.mxu0 %v420
  %539 = vmatpush.bf16.msra.mxu0 %v372
  %540 = vmatmul.bf16.gmra.mxu0 %v471
  %v541 = vpop.f32.mrf.mxu0
  %v542 = vadd.f32 %v442, %v541
  %v543 = vpop.f32.mrf.mxu0
  %v544 = vadd.f32 %v447, %v543
  %545 = vmatmul.bf16.gmra.mxu0 %v474
  %v546 = vpop.f32.mrf.mxu0
  %v547 = vadd.f32 %v452, %v546
  %v548 = vpop.f32.mrf.mxu0
  %v549 = vadd.f32 %v457, %v548
  %550 = vdwg.mxu0
  %551 = vmatpush.bf16.msra.mxu0 0
  %552 = vmatpush.bf16.msra.mxu0 0
  %553 = vmatpush.bf16.msra.mxu0 0
  %554 = vmatpush.bf16.msra.mxu0 0
  %555 = vmatpush.bf16.msra.mxu0 0
  %556 = vmatpush.bf16.msra.mxu0 %v486
  %557 = vmatpush.bf16.msra.mxu0 %v423
  %558 = vmatpush.bf16.msra.mxu0 %v375
  %559 = vmatmul.bf16.gmra.mxu0 %v471
  %v560 = vpop.f32.mrf.mxu0
  %v561 = vadd.f32 %v442, %v560
  %v562 = vpop.f32.mrf.mxu0
  %v563 = vadd.f32 %v447, %v562
  %564 = vmatmul.bf16.gmra.mxu0 %v474
  %v565 = vpop.f32.mrf.mxu0
  %v566 = vadd.f32 %v452, %v565
  %v567 = vpop.f32.mrf.mxu0
  %v568 = vadd.f32 %v457, %v567
  %569 = vdwg.mxu0
  %570 = vmatpush.bf16.msra.mxu0 0
  %571 = vmatpush.bf16.msra.mxu0 0
  %572 = vmatpush.bf16.msra.mxu0 0
  %573 = vmatpush.bf16.msra.mxu0 0
  %574 = vmatpush.bf16.msra.mxu0 0
  %575 = vmatpush.bf16.msra.mxu0 %v489
  %576 = vmatpush.bf16.msra.mxu0 %v426
  %577 = vmatpush.bf16.msra.mxu0 %v378
  %578 = vmatmul.bf16.gmra.mxu0 %v471
  %v579 = vpop.f32.mrf.mxu0
  %v580 = vadd.f32 %v442, %v579
  %v581 = vpop.f32.mrf.mxu0
  %v582 = vadd.f32 %v447, %v581
  %583 = vmatmul.bf16.gmra.mxu0 %v474
  %v584 = vpop.f32.mrf.mxu0
  %v585 = vadd.f32 %v452, %v584
  %v586 = vpop.f32.mrf.mxu0
  %v587 = vadd.f32 %v457, %v586
  %588 = vdwg.mxu0
  %589 = vmatpush.bf16.msra.mxu0 0
  %590 = vmatpush.bf16.msra.mxu0 0
  %591 = vmatpush.bf16.msra.mxu0 0
  %592 = vmatpush.bf16.msra.mxu0 0
  %593 = vmatpush.bf16.msra.mxu0 0
  %594 = vmatpush.bf16.msra.mxu0 %v492
  %595 = vmatpush.bf16.msra.mxu0 %v429
  %596 = vmatpush.bf16.msra.mxu0 %v381
  %597 = vmatmul.bf16.gmra.mxu0 %v471
  %v598 = vpop.f32.mrf.mxu0
  %v599 = vadd.f32 %v442, %v598
  %v600 = vpop.f32.mrf.mxu0
  %v601 = vadd.f32 %v447, %v600
  %602 = vmatmul.bf16.gmra.mxu0 %v474
  %v603 = vpop.f32.mrf.mxu0
  %v604 = vadd.f32 %v452, %v603
  %v605 = vpop.f32.mrf.mxu0
  %v606 = vadd.f32 %v457, %v605
  %607 = vdwg.mxu0
  %v608 = vmax.f32 %v504, 0.0
  %v609 = vmax.f32 %v523, 0.0
  %v610 = vmax.f32 %v542, 0.0
  %v611 = vmax.f32 %v561, 0.0
  %v612 = vmax.f32 %v580, 0.0
  %v613 = vmax.f32 %v599, 0.0
  %v614 = vmax.f32 %v506, 0.0
  %v615 = vmax.f32 %v525, 0.0
  %v616 = vmax.f32 %v544, 0.0
  %v617 = vmax.f32 %v563, 0.0
  %v618 = vmax.f32 %v582, 0.0
  %v619 = vmax.f32 %v601, 0.0
  %v620 = vmax.f32 %v509, 0.0
  %v621 = vmax.f32 %v528, 0.0
  %v622 = vmax.f32 %v547, 0.0
  %v623 = vmax.f32 %v566, 0.0
  %v624 = vmax.f32 %v585, 0.0
  %v625 = vmax.f32 %v604, 0.0
  %v626 = vmax.f32 %v511, 0.0
  %v627 = vmax.f32 %v530, 0.0
  %v628 = vmax.f32 %v549, 0.0
  %v629 = vmax.f32 %v568, 0.0
  %v630 = vmax.f32 %v587, 0.0
  %v631 = vmax.f32 %v606, 0.0
  %v632 = vpack.c.bf16 %v609, %v608
  %v633 = vpack.c.bf16 %v611, %v610
  %v634 = vpack.c.bf16 %v613, %v612
  %v635 = vpack.c.bf16 %v615, %v614
  %v636 = vpack.c.bf16 %v617, %v616
  %v637 = vpack.c.bf16 %v619, %v618
  %v638 = vpack.c.bf16 %v621, %v620
  %v639 = vpack.c.bf16 %v623, %v622
  %v640 = vpack.c.bf16 %v625, %v624
  %v641 = vpack.c.bf16 %v627, %v626
  %v642 = vpack.c.bf16 %v629, %v628
  %v643 = vpack.c.bf16 %v631, %v630
  %644 = vst [vmem:[%s3] sm:$0xff] %v632
  %645 = vst [vmem:[%s3 + $0x8] sm:$0xff] %v633
  %646 = vst [vmem:[%s3 + $0x10] sm:$0xff] %v634
  %647 = vst [vmem:[%s3 + $0x18] sm:$0xff] %v635
  %648 = vst [vmem:[%s3 + $0x20] sm:$0xff] %v636
  %649 = vst [vmem:[%s3 + $0x28] sm:$0xff] %v637
  %650 = vst [vmem:[%s3 + $0x30] sm:$0xff] %v638
  %651 = vst [vmem:[%s3 + $0x38] sm:$0xff] %v639
  %652 = vst [vmem:[%s3 + $0x40] sm:$0xff] %v640
  %653 = vst [vmem:[%s3 + $0x48] sm:$0xff] %v641
  %654 = vst [vmem:[%s3 + $0x50] sm:$0xff] %v642
  %655 = vst [vmem:[%s3 + $0x58] sm:$0xff] %v643
  // Predicated region
  $region14: #{unet_decoder_block.1} parent=0 // pred_check
    _
  $region15: #{unet_decoder_block.1} parent=0 // pred_check_branch
    %657 = sbr.rel (0) target = $region17
  $region16: #{unet_decoder_block.1} parent=0 // pred_region
    _
  $region17: #{unet_decoder_block.1} parent=0 // pred_fallthru
    _
  // Predicated region
  $region18: #{unet_decoder_block.1} parent=0 // pred_check
    _
  $region19: #{unet_decoder_block.1} parent=0 // pred_check_branch
    %659 = sbr.rel (0) target = $region21
  $region20: #{unet_decoder_block.1} parent=0 // pred_region
    _
  $region21: #{unet_decoder_block.1} parent=0 // pred_fallthru
    _

</llo_original>
